<compile_context>
chip_gen: v5e
topology: v5e:2x2
jax: 0.10.0
libtpu: 0.0.40
codegen_flags: <defaults>
</compile_context>

<pallas_src>
import functools

import jax
import jax.numpy as jnp
from jax.experimental import pallas as pl
from jax.experimental.pallas import tpu as pltpu

DROPOUT_P = 0.2
N_EMBED = 32
HIDDEN = 4 * N_EMBED


def _round_up(v, m):
    return (v + m - 1) // m * m


def _mlp(x, w1, b1, w2, b2):
    # bf16 MXU operands, f32 accumulate; everything elementwise stays f32.
    h = jnp.dot(x.astype(jnp.bfloat16), w1.astype(jnp.bfloat16),
                preferred_element_type=jnp.float32) + b1
    h = jnp.maximum(h, 0.0)
    return jnp.dot(h.astype(jnp.bfloat16), w2.astype(jnp.bfloat16),
                   preferred_element_type=jnp.float32) + b2


def _apply_dropout(y, bits_u32, dropout_p):
    # Integer-threshold inverted dropout: keep iff bits >= p * 2^32.
    threshold = jnp.uint32(min(int(round(dropout_p * 4294967296.0)), 0xFFFFFFFF))
    keep = bits_u32 >= threshold
    scale = 1.0 / (1.0 - dropout_p)
    return jnp.where(keep, y * scale, 0.0)


def _ffn_kernel_onchip(seed_ref, x_ref, w1_ref, b1_ref, w2_ref, b2_ref, o_ref,
                       *, dropout_p, training):
    y = _mlp(x_ref[...], w1_ref[...], b1_ref[...], w2_ref[...], b2_ref[...])
    if training and dropout_p > 0.0:
        # Mix the grid position into the seed so every row tile gets a
        # distinct dropout mask.
        pltpu.prng_seed(seed_ref[0] + pl.program_id(0))
        bits = pltpu.prng_random_bits(y.shape)
        if bits.dtype != jnp.uint32:
            bits = pltpu.bitcast(bits, jnp.uint32)
        y = _apply_dropout(y, bits, dropout_p)
    o_ref[...] = y.astype(o_ref.dtype)


def _ffn_kernel_hostbits(x_ref, bits_ref, w1_ref, b1_ref, w2_ref, b2_ref, o_ref,
                         *, dropout_p, training):
    y = _mlp(x_ref[...], w1_ref[...], b1_ref[...], w2_ref[...], b2_ref[...])
    if training and dropout_p > 0.0:
        y = _apply_dropout(y, bits_ref[...], dropout_p)
    o_ref[...] = y.astype(o_ref.dtype)


def feed_forward(x, params, *, seed=0, training=True, dropout_p=DROPOUT_P,
                 tile_rows=4096):
    """x: (..., n_embed) float32.  Returns same shape/dtype."""
    w1, b1, w2, b2 = params
    orig_shape = x.shape
    d = orig_shape[-1]
    x2d = x.reshape(-1, d).astype(jnp.float32)
    n = x2d.shape[0]

    # Row tile: large (amortize ~0.35us/grid-step), multiple of 8 sublanes,
    # and small enough that (tile, 32) f32 tiles stay far under the scoped
    # VMEM budget on every generation (incl. v7x's 64 MiB physical VMEM).
    tile = max(8, min(int(tile_rows), _round_up(n, 8)))
    tile = _round_up(tile, 8)
    n_pad = _round_up(n, tile)
    if n_pad != n:
        x2d = jnp.pad(x2d, ((0, n_pad - n), (0, 0)))
    grid = (n_pad // tile,)

    # index_maps receive (*grid_idx, *scalar_prefetch_refs); accept either arity.
    row_map = lambda i, *_: (i, 0)
    const_map = lambda i, *_: (0, 0)
    x_spec = pl.BlockSpec((tile, d), row_map)
    o_spec = pl.BlockSpec((tile, d), row_map)
    # Weights/biases: full-array blocks, constant index map -> VMEM-resident.
    w1_spec = pl.BlockSpec(w1.shape, const_map)
    b1_spec = pl.BlockSpec(b1.shape, const_map)
    w2_spec = pl.BlockSpec(w2.shape, const_map)
    b2_spec = pl.BlockSpec(b2.shape, const_map)

    out_shape = jax.ShapeDtypeStruct((n_pad, d), jnp.float32)

    if jax.default_backend() == "tpu":
        kernel = functools.partial(_ffn_kernel_onchip,
                                   dropout_p=dropout_p, training=training)
        seed_arr = jnp.asarray([seed], dtype=jnp.int32)
        cost = pl.CostEstimate(
            flops=2 * n_pad * (d * HIDDEN + HIDDEN * d),
            transcendentals=0,
            bytes_accessed=2 * n_pad * d * 4
            + (w1.size + b1.size + w2.size + b2.size) * 4,
        )
        out = pl.pallas_call(
            kernel,
            out_shape=out_shape,
            grid_spec=pltpu.PrefetchScalarGridSpec(
                num_scalar_prefetch=1,          # seed lands in SMEM
                grid=grid,
                in_specs=[x_spec, w1_spec, b1_spec, w2_spec, b2_spec],
                out_specs=o_spec,
            ),
            compiler_params=pltpu.CompilerParams(
                dimension_semantics=("parallel",)),   # v7x: both TCs
            cost_estimate=cost,
        )(seed_arr, x2d, w1, b1, w2, b2)
    else:
        # Non-TPU fallback (e.g. CPU interpret): pltpu.prng_* has no CPU
        # lowering, so draw the dropout bits outside and stream them per tile.
        kernel = functools.partial(_ffn_kernel_hostbits,
                                   dropout_p=dropout_p, training=training)
        bits = jax.random.bits(jax.random.PRNGKey(seed), (n_pad, d), jnp.uint32)
        bits_spec = pl.BlockSpec((tile, d), row_map)
        out = pl.pallas_call(
            kernel,
            out_shape=out_shape,
            grid=grid,
            in_specs=[x_spec, bits_spec, w1_spec, b1_spec, w2_spec, b2_spec],
            out_specs=o_spec,
        )(x2d, bits, w1, b1, w2, b2)

    if n_pad != n:
        out = out[:n]
    return out.reshape(orig_shape)


def init_params(key, n_embed=N_EMBED):
    """Deterministic init mimicking nn.Linear's U(-1/sqrt(fan_in), 1/sqrt(fan_in))."""
    hidden = 4 * n_embed
    k1, k2, k3, k4 = jax.random.split(key, 4)
    bound1 = 1.0 / jnp.sqrt(n_embed)
    bound2 = 1.0 / jnp.sqrt(hidden)
    # weights stored as (in, out)
    w1 = jax.random.uniform(k1, (n_embed, hidden), jnp.float32, -bound1, bound1)
    b1 = jax.random.uniform(k2, (1, hidden), jnp.float32, -bound1, bound1)
    w2 = jax.random.uniform(k3, (hidden, n_embed), jnp.float32, -bound2, bound2)
    b2 = jax.random.uniform(k4, (1, n_embed), jnp.float32, -bound2, bound2)
    return w1, b1, w2, b2


if __name__ == "__main__":
    key = jax.random.PRNGKey(0)
    pkey, xkey = jax.random.split(key)

    params = init_params(pkey)

    # small shapes consistent with the module: (batch=2, seq=8, n_embed=32)
    x = jax.random.normal(xkey, (2, 8, N_EMBED), dtype=jnp.float32)

    # training-mode forward (dropout active, deterministic seed)
    y = feed_forward(x, params, seed=1234, training=True)
    y = jax.block_until_ready(y)
    assert y.shape == x.shape and y.dtype == jnp.float32
    # roughly dropout_p of the outputs should be exactly zero
    zero_frac = float(jnp.mean((y == 0.0).astype(jnp.float32)))
    assert 0.05 < zero_frac < 0.45, f"unexpected dropout zero fraction {zero_frac}"

    # eval-mode check against a pure-JAX reference (same bf16-matmul recipe)
    y_eval = jax.block_until_ready(feed_forward(x, params, training=False))
    w1, b1, w2, b2 = params
    x2 = x.reshape(-1, N_EMBED)
    h_ref = jnp.maximum(
        jnp.dot(x2.astype(jnp.bfloat16), w1.astype(jnp.bfloat16),
                preferred_element_type=jnp.float32) + b1, 0.0)
    ref = jnp.dot(h_ref.astype(jnp.bfloat16), w2.astype(jnp.bfloat16),
                  preferred_element_type=jnp.float32) + b2
    assert jnp.allclose(y_eval.reshape(-1, N_EMBED), ref, atol=1e-2, rtol=1e-2)

    print("KERNEL_OK")
</pallas_src>

<mosaic_0001>
module attributes {stable_mosaic.version = 11 : i64} {
  func.func @_ffn_kernel_hostbits(%arg0: i32, %arg1: memref<16x32xf32, #tpu.memory_space<vmem>>, %arg2: memref<16x32xi32, #tpu.memory_space<vmem>>, %arg3: memref<32x128xf32, #tpu.memory_space<vmem>>, %arg4: memref<1x128xf32, #tpu.memory_space<vmem>>, %arg5: memref<128x32xf32, #tpu.memory_space<vmem>>, %arg6: memref<1x32xf32, #tpu.memory_space<vmem>>, %arg7: memref<16x32xf32, #tpu.memory_space<vmem>>) attributes {dimension_semantics = [#tpu.dimension_semantics<arbitrary>], iteration_bounds = array<i64: 1>, scalar_prefetch = 0 : i64, scratch_operands = 0 : i64, tpu.core_type = #tpu.core_type<tc>, window_params = [{transform_indices = @transform_0, window_bounds = array<i64: 16, 32>}, {transform_indices = @transform_1, window_bounds = array<i64: 16, 32>}, {pipeline_mode = #tpu.pipeline_mode<synchronous>, transform_indices = @transform_2, window_bounds = array<i64: 32, 128>}, {pipeline_mode = #tpu.pipeline_mode<synchronous>, transform_indices = @transform_3, window_bounds = array<i64: 1, 128>}, {pipeline_mode = #tpu.pipeline_mode<synchronous>, transform_indices = @transform_4, window_bounds = array<i64: 128, 32>}, {pipeline_mode = #tpu.pipeline_mode<synchronous>, transform_indices = @transform_5, window_bounds = array<i64: 1, 32>}, {transform_indices = @transform_6, window_bounds = array<i64: 16, 32>}]} {
    %c0 = arith.constant 0 : index
    %c0_0 = arith.constant 0 : index
    %0 = vector.load %arg1[%c0, %c0_0] : memref<16x32xf32, #tpu.memory_space<vmem>>, vector<16x32xf32>
    %c0_1 = arith.constant 0 : index
    %c0_2 = arith.constant 0 : index
    %1 = vector.load %arg3[%c0_1, %c0_2] : memref<32x128xf32, #tpu.memory_space<vmem>>, vector<32x128xf32>
    %c0_3 = arith.constant 0 : index
    %c0_4 = arith.constant 0 : index
    %2 = vector.load %arg4[%c0_3, %c0_4] : memref<1x128xf32, #tpu.memory_space<vmem>>, vector<1x128xf32>
    %c0_5 = arith.constant 0 : index
    %c0_6 = arith.constant 0 : index
    %3 = vector.load %arg5[%c0_5, %c0_6] : memref<128x32xf32, #tpu.memory_space<vmem>>, vector<128x32xf32>
    %c0_7 = arith.constant 0 : index
    %c0_8 = arith.constant 0 : index
    %4 = vector.load %arg6[%c0_7, %c0_8] : memref<1x32xf32, #tpu.memory_space<vmem>>, vector<1x32xf32>
    %5 = arith.truncf %0 : vector<16x32xf32> to vector<16x32xbf16>
    %6 = arith.truncf %1 : vector<32x128xf32> to vector<32x128xbf16>
    %cst = arith.constant dense<0.000000e+00> : vector<16x128xf32>
    %7 = tpu.matmul %5, %6, %cst {dimension_numbers = #tpu.dot_dimension_numbers<[1], [0], [0], [1], [0, 0, 1, 1], [], []>} : vector<16x32xbf16>, vector<32x128xbf16>, vector<16x128xf32> -> vector<16x128xf32>
    %8 = vector.broadcast %2 : vector<1x128xf32> to vector<16x128xf32>
    %9 = arith.addf %7, %8 : vector<16x128xf32>
    %cst_9 = arith.constant 0.000000e+00 : f32
    %10 = vector.broadcast %cst_9 : f32 to vector<16x128xf32>
    %11 = arith.maximumf %9, %10 : vector<16x128xf32>
    %12 = arith.truncf %11 : vector<16x128xf32> to vector<16x128xbf16>
    %13 = arith.truncf %3 : vector<128x32xf32> to vector<128x32xbf16>
    %cst_10 = arith.constant dense<0.000000e+00> : vector<16x32xf32>
    %14 = tpu.matmul %12, %13, %cst_10 {dimension_numbers = #tpu.dot_dimension_numbers<[1], [0], [0], [1], [0, 0, 1, 1], [], []>} : vector<16x128xbf16>, vector<128x32xbf16>, vector<16x32xf32> -> vector<16x32xf32>
    %15 = vector.broadcast %4 : vector<1x32xf32> to vector<16x32xf32>
    %16 = arith.addf %14, %15 : vector<16x32xf32>
    %c0_11 = arith.constant 0 : index
    %c0_12 = arith.constant 0 : index
    %17 = vector.load %arg2[%c0_11, %c0_12] : memref<16x32xi32, #tpu.memory_space<vmem>>, vector<16x32xi32>
    %c858993459_i32 = arith.constant 858993459 : i32
    %18 = vector.broadcast %c858993459_i32 : i32 to vector<16x32xi32>
    %19 = arith.cmpi uge, %17, %18 : vector<16x32xi32>
    %cst_13 = arith.constant 1.250000e+00 : f32
    %20 = vector.broadcast %cst_13 : f32 to vector<16x32xf32>
    %21 = arith.mulf %16, %20 : vector<16x32xf32>
    %cst_14 = arith.constant 0.000000e+00 : f32
    %22 = vector.broadcast %cst_14 : f32 to vector<16x32xf32>
    %23 = arith.select %19, %21, %22 : vector<16x32xi1>, vector<16x32xf32>
    %c0_15 = arith.constant 0 : index
    %c0_16 = arith.constant 0 : index
    %24 = vector.load %arg7[%c0_15, %c0_16] : memref<16x32xf32, #tpu.memory_space<vmem>>, vector<16x32xf32>
    tpu.vector_store %arg7[%c0_15, %c0_16], %23 {strides = array<i32>} : memref<16x32xf32, #tpu.memory_space<vmem>>, vector<16x32xf32>,
    return
  }
  func.func @transform_0(%arg0: i32) -> (i32, i32) {
    %c0_i32 = arith.constant 0 : i32
    %c0_i32_0 = arith.constant 0 : i32
    return %arg0, %c0_i32 : i32, i32
  }
  func.func @transform_1(%arg0: i32) -> (i32, i32) {
    %c0_i32 = arith.constant 0 : i32
    %c0_i32_0 = arith.constant 0 : i32
    return %arg0, %c0_i32 : i32, i32
  }
  func.func @transform_2(%arg0: i32) -> (i32, i32) {
    %c0_i32 = arith.constant 0 : i32
    %c0_i32_0 = arith.constant 0 : i32
    %c0_i32_1 = arith.constant 0 : i32
    return %c0_i32, %c0_i32_0 : i32, i32
  }
  func.func @transform_3(%arg0: i32) -> (i32, i32) {
    %c0_i32 = arith.constant 0 : i32
    %c0_i32_0 = arith.constant 0 : i32
    %c0_i32_1 = arith.constant 0 : i32
    return %c0_i32, %c0_i32_0 : i32, i32
  }
  func.func @transform_4(%arg0: i32) -> (i32, i32) {
    %c0_i32 = arith.constant 0 : i32
    %c0_i32_0 = arith.constant 0 : i32
    %c0_i32_1 = arith.constant 0 : i32
    return %c0_i32, %c0_i32_0 : i32, i32
  }
  func.func @transform_5(%arg0: i32) -> (i32, i32) {
    %c0_i32 = arith.constant 0 : i32
    %c0_i32_0 = arith.constant 0 : i32
    %c0_i32_1 = arith.constant 0 : i32
    return %c0_i32, %c0_i32_0 : i32, i32
  }
  func.func @transform_6(%arg0: i32) -> (i32, i32) {
    %c0_i32 = arith.constant 0 : i32
    %c0_i32_0 = arith.constant 0 : i32
    return %arg0, %c0_i32 : i32, i32
  }
}

</mosaic_0001>

<llo_original>
// kernel: tpu_custom_call.1
$region0: #{tpu_custom_call.1}
  #allocation0 [shape = 'u32[]', space=smem, size = 0x4, offset = 0x4, fixed_abs, tag = 'smem constant byte address 0x4 - core index']
  #allocation1 [shape = 'u32[72,128]{1,0:T(1,128)}', space=vmem, size = 0x9000, scoped, tag = 'internal scratch']
  %s0 = inlined_call_operand.vmem [shape: f32[16,32], index: 0, kind: input, shape index: {}]
  %s1 = inlined_call_operand.vmem [shape: u32[16,32], index: 1, kind: input, shape index: {}]
  %s2 = inlined_call_operand.vmem [shape: f32[32,128], index: 2, kind: input, shape index: {}]
  %s3 = inlined_call_operand.vmem [shape: f32[1,128], index: 3, kind: input, shape index: {}]
  %s4 = inlined_call_operand.vmem [shape: f32[128,32], index: 4, kind: input, shape index: {}]
  %s5 = inlined_call_operand.vmem [shape: f32[1,32], index: 5, kind: input, shape index: {}]
  %s6 = inlined_call_operand.hbm [shape: f32[16,32], index: 6, kind: output, shape index: {}]
  %s7 = sld [smem:[#allocation0]]
  $region34: #{tpu_custom_call.1} parent=0
    _
  %s9 = ssub.s32 1, %s7
  %s10 = scalar_select 0, %s9, %s7
  $region1: #{tpu_custom_call.1} parent=0
    #allocation2 [shape = 'u8[8192]{0}', space=vmem, size = 0x2000, scoped, tag = 'output window, operand 0, single buffered']
    #allocation3 [shape = 's32[1]{0}', space=sflag, size = 0x4, scoped, tag = 'scoped memory for tpu_custom_call.1']
    %11 = vsyncpa [#allocation3], 0
    // Predicated region
    $region2: #{tpu_custom_call.1} parent=1 // pred_check
      _
    $region3: #{tpu_custom_call.1} parent=1 // pred_check_branch
      %13 = sbr.rel (0) target = $region5
    $region4: #{tpu_custom_call.1} parent=1 // pred_region
      _
    $region5: #{tpu_custom_call.1} parent=1 // pred_fallthru
      _
    // Predicated region
    $region6: #{tpu_custom_call.1} parent=1 // pred_check
      _
    $region7: #{tpu_custom_call.1} parent=1 // pred_check_branch
      %15 = sbr.rel (0) target = $region9
    $region8: #{tpu_custom_call.1} parent=1 // pred_region
      _
    $region9: #{tpu_custom_call.1} parent=1 // pred_fallthru
      _
    // Predicated region
    $region10: #{tpu_custom_call.1} parent=1 // pred_check
      _
    $region11: #{tpu_custom_call.1} parent=1 // pred_check_branch
      %17 = sbr.rel (0) target = $region13
    $region12: #{tpu_custom_call.1} parent=1 // pred_region
      _
    $region13: #{tpu_custom_call.1} parent=1 // pred_fallthru
      _
    // Predicated region
    $region14: #{tpu_custom_call.1} parent=1 // pred_check
      _
    $region15: #{tpu_custom_call.1} parent=1 // pred_check_branch
      %19 = sbr.rel (0) target = $region17
    $region16: #{tpu_custom_call.1} parent=1 // pred_region
      _
    $region17: #{tpu_custom_call.1} parent=1 // pred_fallthru
      _
    // Predicated region
    $region18: #{tpu_custom_call.1} parent=1 // pred_check
      _
    $region19: #{tpu_custom_call.1} parent=1 // pred_check_branch
      %21 = sbr.rel (0) target = $region21
    $region20: #{tpu_custom_call.1} parent=1 // pred_region
      _
    $region21: #{tpu_custom_call.1} parent=1 // pred_fallthru
      _
    // Predicated region
    $region22: #{tpu_custom_call.1} parent=1 // pred_check
      _
    $region23: #{tpu_custom_call.1} parent=1 // pred_check_branch
      %23 = sbr.rel (0) target = $region25
    $region24: #{tpu_custom_call.1} parent=1 // pred_region
      _
    $region25: #{tpu_custom_call.1} parent=1 // pred_fallthru
      _
    %v25 = vld [vmem:[%s0] sm:$0xff]
    %v26 = vld [vmem:[%s0 + $0x8] sm:$0xff]
    %v27 = vld [vmem:[%s2] sm:$0xff]
    %v28 = vld [vmem:[%s2 + $0x8] sm:$0xff]
    %v29 = vld [vmem:[%s2 + $0x10] sm:$0xff]
    %v30 = vld [vmem:[%s2 + $0x18] sm:$0xff]
    %v31 = vld [vmem:[%s3] sm:$0x1]
    %v32 = vld [vmem:[%s4] sm:$0xff]
    %v33 = vld [vmem:[%s4 + $0x8] sm:$0xff]
    %v34 = vld [vmem:[%s4 + $0x10] sm:$0xff]
    %v35 = vld [vmem:[%s4 + $0x18] sm:$0xff]
    %v36 = vld [vmem:[%s4 + $0x20] sm:$0xff]
    %v37 = vld [vmem:[%s4 + $0x28] sm:$0xff]
    %v38 = vld [vmem:[%s4 + $0x30] sm:$0xff]
    %v39 = vld [vmem:[%s4 + $0x38] sm:$0xff]
    %v40 = vld [vmem:[%s4 + $0x40] sm:$0xff]
    %v41 = vld [vmem:[%s4 + $0x48] sm:$0xff]
    %v42 = vld [vmem:[%s4 + $0x50] sm:$0xff]
    %v43 = vld [vmem:[%s4 + $0x58] sm:$0xff]
    %v44 = vld [vmem:[%s4 + $0x60] sm:$0xff]
    %v45 = vld [vmem:[%s4 + $0x68] sm:$0xff]
    %v46 = vld [vmem:[%s4 + $0x70] sm:$0xff]
    %v47 = vld [vmem:[%s4 + $0x78] sm:$0xff]
    %v48 = vld [vmem:[%s5] sm:$0x1]
    %v49 = vpack.c.bf16 %v26, %v25
    %v50 = vpack.c.bf16 %v28, %v27
    %v51 = vpack.c.bf16 %v30, %v29
    %v53 = vperm.slane %v31, 0
    %vm55 = vcmask 261120
    %v57 = vsel %vm55, %v49, 0
    %59 = vmatpush.bf16.msra.mxu0 0
    %60 = vmatpush.bf16.msra.mxu0 0
    %61 = vmatpush.bf16.msra.mxu0 0
    %62 = vmatpush.bf16.msra.mxu0 0
    %63 = vmatpush.bf16.msra.mxu0 0
    %64 = vmatpush.bf16.msra.mxu0 0
    %65 = vmatpush.bf16.msra.mxu0 %v51
    %66 = vmatpush.bf16.msra.mxu0 %v50
    %67 = vmatmul.bf16.gmra.mxu0 %v57
    %v68 = vpop.f32.mrf.mxu0
    %v69 = vadd.f32 %v53, %v68
    %v70 = vpop.f32.mrf.mxu0
    %v71 = vadd.f32 %v53, %v70
    %72 = vdwg.mxu0
    %v73 = vmax.f32 %v69, 0.0
    %v74 = vmax.f32 %v71, 0.0
    %v75 = vpack.c.bf16 %v74, %v73
    %v76 = vpack.c.bf16 %v33, %v32
    %v77 = vpack.c.bf16 %v35, %v34
    %v78 = vpack.c.bf16 %v37, %v36
    %v79 = vpack.c.bf16 %v39, %v38
    %v80 = vpack.c.bf16 %v41, %v40
    %v81 = vpack.c.bf16 %v43, %v42
    %v82 = vpack.c.bf16 %v45, %v44
    %v83 = vpack.c.bf16 %v47, %v46
    %v85 = vperm.slane %v48, 0
    %87 = vmatpush.bf16.msra.mxu0 %v83
    %88 = vmatpush.bf16.msra.mxu0 %v82
    %89 = vmatpush.bf16.msra.mxu0 %v81
    %90 = vmatpush.bf16.msra.mxu0 %v80
    %91 = vmatpush.bf16.msra.mxu0 %v79
    %92 = vmatpush.bf16.msra.mxu0 %v78
    %93 = vmatpush.bf16.msra.mxu0 %v77
    %94 = vmatpush.bf16.msra.mxu0 %v76
    %95 = vmatmul.bf16.gmra.mxu0 %v75
    %v96 = vpop.f32.mrf.mxu0
    %v97 = vadd.f32 %v85, %v96
    %v98 = vpop.f32.mrf.mxu0
    %v99 = vadd.f32 %v85, %v98
    %100 = vdwg.mxu0
    %v101 = vld [vmem:[%s1] sm:$0xff]
    %v102 = vld [vmem:[%s1 + $0x8] sm:$0xff]
    %v103 = vadd.s32 %v101, 2147483648
    %vm105 = vcmp.ge.s32.totalorder %v103, 3006477107
    %v106 = vadd.s32 %v102, 2147483648
    %vm108 = vcmp.ge.s32.totalorder %v106, 3006477107
    %v109 = vmul.f32 %v97, 1.25
    %v110 = vmul.f32 %v99, 1.25
    %v111 = vsel %vm105, %v109, 0.0
    %v112 = vsel %vm108, %v110, 0.0
    %113 = vst.msk [vmem:[#allocation2] sm:$0xff] %vm55, %v111
    %114 = vst.msk [vmem:[#allocation2 + $0x8] sm:$0xff] %vm55, %v112
    // Predicated region
    $region26: #{tpu_custom_call.1} parent=1 // pred_check
      _
    $region27: #{tpu_custom_call.1} parent=1 // pred_check_branch
      %116 = sbr.rel (0) target = $region29
    $region28: #{tpu_custom_call.1} parent=1 // pred_region
      %118 = vsyncadd [#allocation3], 0
      %s119 = sshll.u32 [#allocation2], 4
      %s120 = int_to_ptr.vmem [resolvable:$true] %s119
      %s121 = sshll.u32 %s6, 4
      %s122 = int_to_ptr.hbm [resolvable:$true] %s121
      %127 = dma.vmem_to_hbm [thread:$0]  %s120, 256, %s122, [#allocation3], 128, 128, 8
    $region29: #{tpu_custom_call.1} parent=1 // pred_fallthru
      _
    // Predicated region
    $region30: #{tpu_custom_call.1} parent=1 // pred_check
      _
    $region31: #{tpu_custom_call.1} parent=1 // pred_check_branch
      %129 = sbr.rel (0) target = $region33
    $region32: #{tpu_custom_call.1} parent=1 // pred_region
      %131 = dma.done [#allocation3], 256
    $region33: #{tpu_custom_call.1} parent=1 // pred_fallthru
      _
    %132 = vsyncpa [#allocation3], 1

</llo_original>
